<compile_context>
chip_gen: v7x
topology: tpu7x:2x2x1
jax: 0.10.0
libtpu: 0.0.40
codegen_flags: <defaults>
</compile_context>

<pallas_src>
import math

import jax
import jax.numpy as jnp
from jax import lax
from jax.experimental import pallas as pl
from jax.experimental.pallas import tpu as pltpu


def _round_up(n, m):
    return ((n + m - 1) // m) * m


def qnetwork_kernel(x_ref, w1_ref, b1_ref, w2_ref, b2_ref, w3_ref, b3_ref, o_ref):
    # x_ref is a batch-major (bt, S) block.  The first matmul contracts the
    # minor (feature) dim of BOTH operands: W1 (16, S) x (bt, S) -> (16, bt),
    # i.e. W1 @ x^T, so activations become feature-major with the batch
    # dimension on the 128-lane axis (lane-dense VPU ops and stores).
    #
    # NOTE: for the partial edge block, out-of-bounds batch columns of x are
    # undefined; they only feed the matching output columns, which are masked
    # on store.  Do NOT add any reduction across the batch axis in here.
    x = x_ref[...]                                                        # (bt, S)  f32
    h1 = lax.dot_general(w1_ref[...], x, (((1,), (1,)), ((), ())),
                         preferred_element_type=jnp.float32)              # (16, bt) f32
    h1 = jnp.maximum(h1 + b1_ref[...], 0.0)
    h2 = jnp.dot(w2_ref[...], h1, preferred_element_type=jnp.float32)     # (8, bt)  f32
    h2 = jnp.maximum(h2 + b2_ref[...], 0.0)
    out = jnp.dot(w3_ref[...], h2, preferred_element_type=jnp.float32)    # (A, bt)  f32
    o_ref[...] = (out + b3_ref[...]).astype(o_ref.dtype)


def qnetwork_forward(x, params, *, batch_tile=16384, min_grid_steps=4):
    """x: (B, state_size) float32 -> (B, action_size) float32."""
    w1, b1, w2, b2, w3, b3 = params
    x = x.astype(jnp.float32)
    B, S = x.shape
    A = w3.shape[0]

    # Batch tile: multiple of 128 lanes, large (amortizes ~0.35 us/step grid
    # overhead), but capped so the grid keeps >= min_grid_steps steps when B is
    # big enough — on v7x the "parallel" grid axis shards tiles across both TCs.
    bt = min(batch_tile, _round_up(pl.cdiv(B, min_grid_steps), 128))
    bt = max(bt, 128)
    grid = (pl.cdiv(B, bt),)

    # Full-array blocks with constant index_maps: weights/biases are DMA'd once
    # and stay VMEM-resident across all batch tiles.
    def resident(arr):
        return pl.BlockSpec(arr.shape, lambda i: (0, 0))

    # Per-step VMEM: x block (bt, S) is lane-padded to 128 lanes (512 B/row of
    # f32); out block (A, bt) is sublane-padded to 8 rows; both double-buffered.
    # Pin the scoped-VMEM limit explicitly (v7x has only 64 MiB physical VMEM).
    vmem_limit = int(min(56 * 1024 * 1024, 2 * bt * 512 + 2 * bt * 32 + (4 << 20)))

    param_bytes = sum(int(p.size) * p.dtype.itemsize for p in params)
    cost = pl.CostEstimate(
        flops=2 * B * (S * 16 + 16 * 8 + 8 * A),
        transcendentals=0,
        bytes_accessed=B * S * 4 + B * A * 4 + param_bytes,
    )

    out_fm = pl.pallas_call(
        qnetwork_kernel,
        out_shape=jax.ShapeDtypeStruct((A, B), jnp.float32),
        grid=grid,
        in_specs=[
            pl.BlockSpec((bt, S), lambda i: (i, 0)),   # x streams batch-major tiles
            resident(w1), resident(b1),
            resident(w2), resident(b2),
            resident(w3), resident(b3),
        ],
        out_specs=pl.BlockSpec((A, bt), lambda i: (0, i)),   # feature-major, lane-dense
        compiler_params=pltpu.CompilerParams(
            dimension_semantics=("parallel",),
            vmem_limit_bytes=vmem_limit,
        ),
        cost_estimate=cost,
    )(x, w1, b1, w2, b2, w3, b3)

    # Tiny (A, B) -> (B, A) transpose to match the PyTorch module's output
    # layout; this is the smallest array in the pipeline (A=action_size).
    return out_fm.T


def init_linear_params(key, in_features, out_features):
    """PyTorch nn.Linear default init: U(-1/sqrt(fan_in), 1/sqrt(fan_in)).

    Weight kept in PyTorch's (out, in) layout (kernel computes W @ x^T);
    bias kept as (out, 1) for feature-major broadcasting.
    """
    kw, kb = jax.random.split(key)
    bound = 1.0 / math.sqrt(in_features)
    w = jax.random.uniform(kw, (out_features, in_features), jnp.float32, -bound, bound)
    b = jax.random.uniform(kb, (out_features, 1), jnp.float32, -bound, bound)
    return w, b


def make_qnetwork_params(key, state_size, action_size):
    k1, k2, k3 = jax.random.split(key, 3)
    w1, b1 = init_linear_params(k1, state_size, 16)
    w2, b2 = init_linear_params(k2, 16, 8)
    w3, b3 = init_linear_params(k3, 8, action_size)
    return (w1, b1, w2, b2, w3, b3)


def _reference(x, params):
    """Plain-JAX f32 mirror of the PyTorch QNetwork forward."""
    w1, b1, w2, b2, w3, b3 = params
    h1 = jnp.maximum(x @ w1.T + b1.T, 0.0)
    h2 = jnp.maximum(h1 @ w2.T + b2.T, 0.0)
    return h2 @ w3.T + b3.T


if __name__ == "__main__":
    state_size = 8
    action_size = 4
    batch = 2

    key = jax.random.PRNGKey(0)
    k_params, k_x, k_x2, k_x3 = jax.random.split(key, 4)

    params = make_qnetwork_params(k_params, state_size, action_size)

    # Small deterministic input matching the module spec.
    x = jax.random.normal(k_x, (batch, state_size), jnp.float32)
    out = qnetwork_forward(x, params)
    jax.block_until_ready(out)
    assert out.shape == (batch, action_size)
    assert jnp.allclose(out, _reference(x, params), atol=1e-3, rtol=1e-3)

    # Multi-tile grid with a masked partial edge block (300 = 2*128 + 44).
    x2 = jax.random.normal(k_x2, (300, state_size), jnp.float32)
    out2 = qnetwork_forward(x2, params, batch_tile=128)
    jax.block_until_ready(out2)
    assert out2.shape == (300, action_size)
    assert jnp.allclose(out2, _reference(x2, params), atol=1e-3, rtol=1e-3)

    # Default tiling path: tile capped so the grid keeps >= 4 steps (v7x TCs).
    x3 = jax.random.normal(k_x3, (2048, state_size), jnp.float32)
    out3 = qnetwork_forward(x3, params)
    jax.block_until_ready(out3)
    assert out3.shape == (2048, action_size)
    assert jnp.allclose(out3, _reference(x3, params), atol=1e-3, rtol=1e-3)

    print("KERNEL_OK")
</pallas_src>

<mosaic_0001>
module attributes {stable_mosaic.version = 11 : i64} {
  func.func @qnetwork_kernel(%arg0: i32, %arg1: memref<128x8xf32, #tpu.memory_space<vmem>>, %arg2: memref<16x8xf32, #tpu.memory_space<vmem>>, %arg3: memref<16x1xf32, #tpu.memory_space<vmem>>, %arg4: memref<8x16xf32, #tpu.memory_space<vmem>>, %arg5: memref<8x1xf32, #tpu.memory_space<vmem>>, %arg6: memref<4x8xf32, #tpu.memory_space<vmem>>, %arg7: memref<4x1xf32, #tpu.memory_space<vmem>>, %arg8: memref<4x128xf32, #tpu.memory_space<vmem>>) attributes {dimension_semantics = [#tpu.dimension_semantics<parallel>], iteration_bounds = array<i64: 1>, scalar_prefetch = 0 : i64, scratch_operands = 0 : i64, tpu.core_type = #tpu.core_type<tc>, window_params = [{transform_indices = @transform_0, window_bounds = array<i64: 128, 8>}, {pipeline_mode = #tpu.pipeline_mode<synchronous>, transform_indices = @transform_1, window_bounds = array<i64: 16, 8>}, {pipeline_mode = #tpu.pipeline_mode<synchronous>, transform_indices = @transform_2, window_bounds = array<i64: 16, 1>}, {pipeline_mode = #tpu.pipeline_mode<synchronous>, transform_indices = @transform_3, window_bounds = array<i64: 8, 16>}, {pipeline_mode = #tpu.pipeline_mode<synchronous>, transform_indices = @transform_4, window_bounds = array<i64: 8, 1>}, {pipeline_mode = #tpu.pipeline_mode<synchronous>, transform_indices = @transform_5, window_bounds = array<i64: 4, 8>}, {pipeline_mode = #tpu.pipeline_mode<synchronous>, transform_indices = @transform_6, window_bounds = array<i64: 4, 1>}, {transform_indices = @transform_7, window_bounds = array<i64: 4, 128>}]} {
    %c0 = arith.constant 0 : index
    %c0_0 = arith.constant 0 : index
    %0 = vector.load %arg1[%c0, %c0_0] : memref<128x8xf32, #tpu.memory_space<vmem>>, vector<128x8xf32>
    %c0_1 = arith.constant 0 : index
    %c0_2 = arith.constant 0 : index
    %1 = vector.load %arg2[%c0_1, %c0_2] : memref<16x8xf32, #tpu.memory_space<vmem>>, vector<16x8xf32>
    %cst = arith.constant dense<0.000000e+00> : vector<16x128xf32>
    %2 = tpu.matmul %1, %0, %cst {dimension_numbers = #tpu.dot_dimension_numbers<[1], [1], [0], [0], [0, 0, 1, 0], [], []>} : vector<16x8xf32>, vector<128x8xf32>, vector<16x128xf32> -> vector<16x128xf32>
    %c0_3 = arith.constant 0 : index
    %c0_4 = arith.constant 0 : index
    %3 = vector.load %arg3[%c0_3, %c0_4] : memref<16x1xf32, #tpu.memory_space<vmem>>, vector<16x1xf32>
    %4 = vector.broadcast %3 : vector<16x1xf32> to vector<16x128xf32>
    %5 = arith.addf %2, %4 : vector<16x128xf32>
    %cst_5 = arith.constant 0.000000e+00 : f32
    %6 = vector.broadcast %cst_5 : f32 to vector<16x128xf32>
    %7 = arith.maximumf %5, %6 : vector<16x128xf32>
    %c0_6 = arith.constant 0 : index
    %c0_7 = arith.constant 0 : index
    %8 = vector.load %arg4[%c0_6, %c0_7] : memref<8x16xf32, #tpu.memory_space<vmem>>, vector<8x16xf32>
    %cst_8 = arith.constant dense<0.000000e+00> : vector<8x128xf32>
    %9 = tpu.matmul %8, %7, %cst_8 {dimension_numbers = #tpu.dot_dimension_numbers<[1], [0], [0], [1], [0, 0, 1, 1], [], []>} : vector<8x16xf32>, vector<16x128xf32>, vector<8x128xf32> -> vector<8x128xf32>
    %c0_9 = arith.constant 0 : index
    %c0_10 = arith.constant 0 : index
    %10 = vector.load %arg5[%c0_9, %c0_10] : memref<8x1xf32, #tpu.memory_space<vmem>>, vector<8x1xf32>
    %11 = vector.broadcast %10 : vector<8x1xf32> to vector<8x128xf32>
    %12 = arith.addf %9, %11 : vector<8x128xf32>
    %cst_11 = arith.constant 0.000000e+00 : f32
    %13 = vector.broadcast %cst_11 : f32 to vector<8x128xf32>
    %14 = arith.maximumf %12, %13 : vector<8x128xf32>
    %c0_12 = arith.constant 0 : index
    %c0_13 = arith.constant 0 : index
    %15 = vector.load %arg6[%c0_12, %c0_13] : memref<4x8xf32, #tpu.memory_space<vmem>>, vector<4x8xf32>
    %cst_14 = arith.constant dense<0.000000e+00> : vector<4x128xf32>
    %16 = tpu.matmul %15, %14, %cst_14 {dimension_numbers = #tpu.dot_dimension_numbers<[1], [0], [0], [1], [0, 0, 1, 1], [], []>} : vector<4x8xf32>, vector<8x128xf32>, vector<4x128xf32> -> vector<4x128xf32>
    %c0_15 = arith.constant 0 : index
    %c0_16 = arith.constant 0 : index
    %17 = vector.load %arg7[%c0_15, %c0_16] : memref<4x1xf32, #tpu.memory_space<vmem>>, vector<4x1xf32>
    %18 = vector.broadcast %17 : vector<4x1xf32> to vector<4x128xf32>
    %19 = arith.addf %16, %18 : vector<4x128xf32>
    %c0_17 = arith.constant 0 : index
    %c0_18 = arith.constant 0 : index
    %20 = vector.load %arg8[%c0_17, %c0_18] : memref<4x128xf32, #tpu.memory_space<vmem>>, vector<4x128xf32>
    tpu.vector_store %arg8[%c0_17, %c0_18], %19 {strides = array<i32>} : memref<4x128xf32, #tpu.memory_space<vmem>>, vector<4x128xf32>,
    return
  }
  func.func @transform_0(%arg0: i32) -> (i32, i32) {
    %c0_i32 = arith.constant 0 : i32
    %c0_i32_0 = arith.constant 0 : i32
    return %arg0, %c0_i32 : i32, i32
  }
  func.func @transform_1(%arg0: i32) -> (i32, i32) {
    %c0_i32 = arith.constant 0 : i32
    %c0_i32_0 = arith.constant 0 : i32
    %c0_i32_1 = arith.constant 0 : i32
    return %c0_i32, %c0_i32_0 : i32, i32
  }
  func.func @transform_2(%arg0: i32) -> (i32, i32) {
    %c0_i32 = arith.constant 0 : i32
    %c0_i32_0 = arith.constant 0 : i32
    %c0_i32_1 = arith.constant 0 : i32
    return %c0_i32, %c0_i32_0 : i32, i32
  }
  func.func @transform_3(%arg0: i32) -> (i32, i32) {
    %c0_i32 = arith.constant 0 : i32
    %c0_i32_0 = arith.constant 0 : i32
    %c0_i32_1 = arith.constant 0 : i32
    return %c0_i32, %c0_i32_0 : i32, i32
  }
  func.func @transform_4(%arg0: i32) -> (i32, i32) {
    %c0_i32 = arith.constant 0 : i32
    %c0_i32_0 = arith.constant 0 : i32
    %c0_i32_1 = arith.constant 0 : i32
    return %c0_i32, %c0_i32_0 : i32, i32
  }
  func.func @transform_5(%arg0: i32) -> (i32, i32) {
    %c0_i32 = arith.constant 0 : i32
    %c0_i32_0 = arith.constant 0 : i32
    %c0_i32_1 = arith.constant 0 : i32
    return %c0_i32, %c0_i32_0 : i32, i32
  }
  func.func @transform_6(%arg0: i32) -> (i32, i32) {
    %c0_i32 = arith.constant 0 : i32
    %c0_i32_0 = arith.constant 0 : i32
    %c0_i32_1 = arith.constant 0 : i32
    return %c0_i32, %c0_i32_0 : i32, i32
  }
  func.func @transform_7(%arg0: i32) -> (i32, i32) {
    %c0_i32 = arith.constant 0 : i32
    %c0_i32_0 = arith.constant 0 : i32
    return %c0_i32, %arg0 : i32, i32
  }
}

</mosaic_0001>

<llo_original>
// kernel: tpu_custom_call.1
$region0: #{tpu_custom_call.1}
  #allocation0 [shape = 'u32[]', space=smem, size = 0x4, offset = 0x4, fixed_abs, tag = 'smem constant byte address 0x4 - core index']
  #allocation1 [shape = 'u32[144,128]{1,0:T(1,128)}', space=vmem, size = 0x12000, scoped, tag = 'internal scratch']
  %s0 = inlined_call_operand.vmem [shape: f32[2,8], index: 0, kind: input, shape index: {}]
  %s1 = inlined_call_operand.vmem [shape: f32[16,8], index: 1, kind: input, shape index: {}]
  %s2 = inlined_call_operand.vmem [shape: f32[16,1], index: 2, kind: input, shape index: {}]
  %s3 = inlined_call_operand.vmem [shape: f32[8,16], index: 3, kind: input, shape index: {}]
  %s4 = inlined_call_operand.vmem [shape: f32[8,1], index: 4, kind: input, shape index: {}]
  %s5 = inlined_call_operand.vmem [shape: f32[4,8], index: 5, kind: input, shape index: {}]
  %s6 = inlined_call_operand.vmem [shape: f32[4,1], index: 6, kind: input, shape index: {}]
  %s7 = inlined_call_operand.vmem [shape: f32[4,2], index: 7, kind: output, shape index: {}]
  %s8 = sld [smem:[#allocation0]]
  $region38: #{tpu_custom_call.1} parent=0
    _
  %s10 = ssub.s32 1, %s8
  %s11 = scalar_select 0, %s10, %s8
  // Predicated region
  $region2: #{tpu_custom_call.1} parent=0 // pred_check
    _
  $region3: #{tpu_custom_call.1} parent=0 // pred_check_branch
    %13 = sbr.rel (0) target = $region5
  $region4: #{tpu_custom_call.1} parent=0 // pred_region
    _
  $region5: #{tpu_custom_call.1} parent=0 // pred_fallthru
    _
  // Predicated region
  $region6: #{tpu_custom_call.1} parent=0 // pred_check
    _
  $region7: #{tpu_custom_call.1} parent=0 // pred_check_branch
    %15 = sbr.rel (0) target = $region9
  $region8: #{tpu_custom_call.1} parent=0 // pred_region
    _
  $region9: #{tpu_custom_call.1} parent=0 // pred_fallthru
    _
  // Predicated region
  $region10: #{tpu_custom_call.1} parent=0 // pred_check
    _
  $region11: #{tpu_custom_call.1} parent=0 // pred_check_branch
    %17 = sbr.rel (0) target = $region13
  $region12: #{tpu_custom_call.1} parent=0 // pred_region
    _
  $region13: #{tpu_custom_call.1} parent=0 // pred_fallthru
    _
  // Predicated region
  $region14: #{tpu_custom_call.1} parent=0 // pred_check
    _
  $region15: #{tpu_custom_call.1} parent=0 // pred_check_branch
    %19 = sbr.rel (0) target = $region17
  $region16: #{tpu_custom_call.1} parent=0 // pred_region
    _
  $region17: #{tpu_custom_call.1} parent=0 // pred_fallthru
    _
  // Predicated region
  $region18: #{tpu_custom_call.1} parent=0 // pred_check
    _
  $region19: #{tpu_custom_call.1} parent=0 // pred_check_branch
    %21 = sbr.rel (0) target = $region21
  $region20: #{tpu_custom_call.1} parent=0 // pred_region
    _
  $region21: #{tpu_custom_call.1} parent=0 // pred_fallthru
    _
  // Predicated region
  $region22: #{tpu_custom_call.1} parent=0 // pred_check
    _
  $region23: #{tpu_custom_call.1} parent=0 // pred_check_branch
    %23 = sbr.rel (0) target = $region25
  $region24: #{tpu_custom_call.1} parent=0 // pred_region
    _
  $region25: #{tpu_custom_call.1} parent=0 // pred_fallthru
    _
  // Predicated region
  $region26: #{tpu_custom_call.1} parent=0 // pred_check
    _
  $region27: #{tpu_custom_call.1} parent=0 // pred_check_branch
    %25 = sbr.rel (0) target = $region29
  $region28: #{tpu_custom_call.1} parent=0 // pred_region
    _
  $region29: #{tpu_custom_call.1} parent=0 // pred_fallthru
    _
  %v26 = vld [vmem:[%s0] sm:$0xff]
  %v27 = vld [vmem:[%s0 + $0x8] sm:$0xff]
  %v28 = vld [vmem:[%s0 + $0x10] sm:$0xff]
  %v29 = vld [vmem:[%s0 + $0x18] sm:$0xff]
  %v30 = vld [vmem:[%s0 + $0x20] sm:$0xff]
  %v31 = vld [vmem:[%s0 + $0x28] sm:$0xff]
  %v32 = vld [vmem:[%s0 + $0x30] sm:$0xff]
  %v33 = vld [vmem:[%s0 + $0x38] sm:$0xff]
  %v34 = vld [vmem:[%s0 + $0x40] sm:$0xff]
  %v35 = vld [vmem:[%s0 + $0x48] sm:$0xff]
  %v36 = vld [vmem:[%s0 + $0x50] sm:$0xff]
  %v37 = vld [vmem:[%s0 + $0x58] sm:$0xff]
  %v38 = vld [vmem:[%s0 + $0x60] sm:$0xff]
  %v39 = vld [vmem:[%s0 + $0x68] sm:$0xff]
  %v40 = vld [vmem:[%s0 + $0x70] sm:$0xff]
  %v41 = vld [vmem:[%s0 + $0x78] sm:$0xff]
  %v42 = vld [vmem:[%s1] sm:$0xff]
  %v43 = vld [vmem:[%s1 + $0x8] sm:$0xff]
  %v44 = vld [vmem:[%s2] sm:$0xff]
  %v45 = vld [vmem:[%s2 + $0x8] sm:$0xff]
  %47 = vset.pattern.permute.xlu0 0
  %48 = vperm.xlu0 %47, %v44
  %v49 = vpop.permute.xlu0 %48
  %52 = vset.pattern.permute.xlu0 0
  %53 = vperm.xlu0 %52, %v45
  %v54 = vpop.permute.xlu0 %53
  %vm56 = vcmask 64512
  %v58 = vsel %vm56, %v42, 0
  %v61 = vsel %vm56, %v43, 0
  %v64 = vsel %vm56, %v26, 0
  %v67 = vsel %vm56, %v27, 0
  %v70 = vsel %vm56, %v28, 0
  %v73 = vsel %vm56, %v29, 0
  %v76 = vsel %vm56, %v30, 0
  %v79 = vsel %vm56, %v31, 0
  %v82 = vsel %vm56, %v32, 0
  %v85 = vsel %vm56, %v33, 0
  %v88 = vsel %vm56, %v34, 0
  %v91 = vsel %vm56, %v35, 0
  %v94 = vsel %vm56, %v36, 0
  %v97 = vsel %vm56, %v37, 0
  %v100 = vsel %vm56, %v38, 0
  %v103 = vsel %vm56, %v39, 0
  %v106 = vsel %vm56, %v40, 0
  %v109 = vsel %vm56, %v41, 0
  %111 = vmatprep.subr.mxu0 0.0
  %112 = vmatpush1.xpose.msra.mxu0 %v64
  %113 = vmatprep.subr.mxu0 0.0
  %114 = vmatpush1.xpose.msra.mxu0 %v67
  %115 = vmatprep.subr.mxu0 0.0
  %116 = vmatpush1.xpose.msra.mxu0 %v70
  %117 = vmatprep.subr.mxu0 0.0
  %118 = vmatpush1.xpose.msra.mxu0 %v73
  %119 = vmatprep.subr.mxu0 0.0
  %120 = vmatpush1.xpose.msra.mxu0 %v76
  %121 = vmatprep.subr.mxu0 0.0
  %122 = vmatpush1.xpose.msra.mxu0 %v79
  %123 = vmatprep.subr.mxu0 0.0
  %124 = vmatpush1.xpose.msra.mxu0 %v82
  %125 = vmatprep.subr.mxu0 0.0
  %126 = vmatpush1.xpose.msra.mxu0 %v85
  %127 = vmatprep.subr.mxu0 0.0
  %128 = vmatpush1.xpose.msra.mxu0 %v88
  %129 = vmatprep.subr.mxu0 0.0
  %130 = vmatpush1.xpose.msra.mxu0 %v91
  %131 = vmatprep.subr.mxu0 0.0
  %132 = vmatpush1.xpose.msra.mxu0 %v94
  %133 = vmatprep.subr.mxu0 0.0
  %134 = vmatpush1.xpose.msra.mxu0 %v97
  %135 = vmatprep.subr.mxu0 0.0
  %136 = vmatpush1.xpose.msra.mxu0 %v100
  %137 = vmatprep.subr.mxu0 0.0
  %138 = vmatpush1.xpose.msra.mxu0 %v103
  %139 = vmatprep.subr.mxu0 0.0
  %140 = vmatpush1.xpose.msra.mxu0 %v106
  %141 = vmatprep.subr.mxu0 0.0
  %142 = vmatpush1.xpose.msra.mxu0 %v109
  %143 = vmatprep.subr.mxu0 0.0
  %144 = vmatpush1.xpose.msra.mxu0 0.0
  %145 = vmatprep.subr.mxu0 0.0
  %146 = vmatpush1.xpose.msra.mxu0 0.0
  %147 = vmatprep.subr.mxu0 0.0
  %148 = vmatpush1.xpose.msra.mxu0 0.0
  %149 = vmatprep.subr.mxu0 0.0
  %150 = vmatpush1.xpose.msra.mxu0 0.0
  %151 = vmatprep.subr.mxu0 0.0
  %152 = vmatpush1.xpose.msra.mxu0 0.0
  %153 = vmatprep.subr.mxu0 0.0
  %154 = vmatpush1.xpose.msra.mxu0 0.0
  %155 = vmatprep.subr.mxu0 0.0
  %156 = vmatpush1.xpose.msra.mxu0 0.0
  %157 = vmatprep.subr.mxu0 0.0
  %158 = vmatpush1.xpose.msra.mxu0 0.0
  %159 = vmatprep.subr.mxu0 0.0
  %160 = vmatpush1.xpose.msra.mxu0 0.0
  %161 = vmatprep.subr.mxu0 0.0
  %162 = vmatpush1.xpose.msra.mxu0 0.0
  %163 = vmatprep.subr.mxu0 0.0
  %164 = vmatpush1.xpose.msra.mxu0 0.0
  %165 = vmatprep.subr.mxu0 0.0
  %166 = vmatpush1.xpose.msra.mxu0 0.0
  %167 = vmatprep.subr.mxu0 0.0
  %168 = vmatpush1.xpose.msra.mxu0 0.0
  %169 = vmatprep.subr.mxu0 0.0
  %170 = vmatpush1.xpose.msra.mxu0 0.0
  %171 = vmatprep.subr.mxu0 0.0
  %172 = vmatpush1.xpose.msra.mxu0 0.0
  %173 = vmatprep.subr.mxu0 0.0
  %174 = vmatpush1.xpose.msra.mxu0 0.0
  %175 = vmatprep.mubr.f32.mxu0 0.0
  %176 = vmatmul.mubr.f32.gmra.mrb[0].mxu0 %v58
  %v177 = vpop.f32.mrb[0].mxu0
  %v178 = vadd.f32 %v49, %v177
  %v179 = vpop.f32.mrb[0].mxu0
  %180 = vmatprep.mubr.f32.mxu0 0.0
  %181 = vmatmul.mubr.f32.gmra.mrb[0].mxu0 %v61
  %v182 = vpop.f32.mrb[0].mxu0
  %v183 = vadd.f32 %v54, %v182
  %v184 = vpop.f32.mrb[0].mxu0
  %185 = vdwg.mxu0
  %v186 = vmax.f32 %v178, 0.0
  %v187 = vmax.f32 %v183, 0.0
  %v188 = vld [vmem:[%s3] sm:$0xff]
  %v189 = vld [vmem:[%s4] sm:$0xff]
  %191 = vset.pattern.permute.xlu0 0
  %192 = vperm.xlu0 %191, %v189
  %v193 = vpop.permute.xlu0 %192
  %vm195 = vcmask 130048
  %v197 = vsel %vm195, %v188, 0
  %199 = vmatprep.subr.mxu0 0.0
  %200 = vmatpush1.msra.mxu0 %v186
  %201 = vmatprep.subr.mxu0 0.0
  %202 = vmatpush1.msra.mxu0 %v187
  %203 = vmatprep.subr.mxu0 0.0
  %204 = vmatpush1.msra.mxu0 0.0
  %205 = vmatprep.subr.mxu0 0.0
  %206 = vmatpush1.msra.mxu0 0.0
  %207 = vmatprep.subr.mxu0 0.0
  %208 = vmatpush1.msra.mxu0 0.0
  %209 = vmatprep.subr.mxu0 0.0
  %210 = vmatpush1.msra.mxu0 0.0
  %211 = vmatprep.subr.mxu0 0.0
  %212 = vmatpush1.msra.mxu0 0.0
  %213 = vmatprep.subr.mxu0 0.0
  %214 = vmatpush1.msra.mxu0 0.0
  %215 = vmatprep.subr.mxu0 0.0
  %216 = vmatpush1.msra.mxu0 0.0
  %217 = vmatprep.subr.mxu0 0.0
  %218 = vmatpush1.msra.mxu0 0.0
  %219 = vmatprep.subr.mxu0 0.0
  %220 = vmatpush1.msra.mxu0 0.0
  %221 = vmatprep.subr.mxu0 0.0
  %222 = vmatpush1.msra.mxu0 0.0
  %223 = vmatprep.subr.mxu0 0.0
  %224 = vmatpush1.msra.mxu0 0.0
  %225 = vmatprep.subr.mxu0 0.0
  %226 = vmatpush1.msra.mxu0 0.0
  %227 = vmatprep.subr.mxu0 0.0
  %228 = vmatpush1.msra.mxu0 0.0
  %229 = vmatprep.subr.mxu0 0.0
  %230 = vmatpush1.msra.mxu0 0.0
  %231 = vmatprep.subr.mxu0 0.0
  %232 = vmatpush1.msra.mxu0 0.0
  %233 = vmatprep.subr.mxu0 0.0
  %234 = vmatpush1.msra.mxu0 0.0
  %235 = vmatprep.subr.mxu0 0.0
  %236 = vmatpush1.msra.mxu0 0.0
  %237 = vmatprep.subr.mxu0 0.0
  %238 = vmatpush1.msra.mxu0 0.0
  %239 = vmatprep.subr.mxu0 0.0
  %240 = vmatpush1.msra.mxu0 0.0
  %241 = vmatprep.subr.mxu0 0.0
  %242 = vmatpush1.msra.mxu0 0.0
  %243 = vmatprep.subr.mxu0 0.0
  %244 = vmatpush1.msra.mxu0 0.0
  %245 = vmatprep.subr.mxu0 0.0
  %246 = vmatpush1.msra.mxu0 0.0
  %247 = vmatprep.subr.mxu0 0.0
  %248 = vmatpush1.msra.mxu0 0.0
  %249 = vmatprep.subr.mxu0 0.0
  %250 = vmatpush1.msra.mxu0 0.0
  %251 = vmatprep.subr.mxu0 0.0
  %252 = vmatpush1.msra.mxu0 0.0
  %253 = vmatprep.subr.mxu0 0.0
  %254 = vmatpush1.msra.mxu0 0.0
  %255 = vmatprep.subr.mxu0 0.0
  %256 = vmatpush1.msra.mxu0 0.0
  %257 = vmatprep.subr.mxu0 0.0
  %258 = vmatpush1.msra.mxu0 0.0
  %259 = vmatprep.subr.mxu0 0.0
  %260 = vmatpush1.msra.mxu0 0.0
  %261 = vmatprep.subr.mxu0 0.0
  %262 = vmatpush1.msra.mxu0 0.0
  %263 = vmatprep.mubr.f32.mxu0 0.0
  %264 = vmatmul.mubr.f32.gmra.mrb[0].mxu0 %v197
  %v265 = vpop.f32.mrb[0].mxu0
  %v266 = vadd.f32 %v193, %v265
  %v267 = vpop.f32.mrb[0].mxu0
  %268 = vdwg.mxu0
  %v269 = vmax.f32 %v266, 0.0
  %v270 = vld [vmem:[%s5] sm:$0xf]
  %v271 = vld [vmem:[%s6] sm:$0xf]
  %273 = vset.pattern.permute.xlu0 0
  %274 = vperm.xlu0 %273, %v271
  %v275 = vpop.permute.xlu0 %274
  %v278 = vsel %vm56, %v270, 0
  %280 = vmatprep.subr.mxu0 0.0
  %281 = vmatpush1.msra.mxu0 %v269
  %282 = vmatprep.subr.mxu0 0.0
  %283 = vmatpush1.msra.mxu0 0.0
  %284 = vmatprep.subr.mxu0 0.0
  %285 = vmatpush1.msra.mxu0 0.0
  %286 = vmatprep.subr.mxu0 0.0
  %287 = vmatpush1.msra.mxu0 0.0
  %288 = vmatprep.subr.mxu0 0.0
  %289 = vmatpush1.msra.mxu0 0.0
  %290 = vmatprep.subr.mxu0 0.0
  %291 = vmatpush1.msra.mxu0 0.0
  %292 = vmatprep.subr.mxu0 0.0
  %293 = vmatpush1.msra.mxu0 0.0
  %294 = vmatprep.subr.mxu0 0.0
  %295 = vmatpush1.msra.mxu0 0.0
  %296 = vmatprep.subr.mxu0 0.0
  %297 = vmatpush1.msra.mxu0 0.0
  %298 = vmatprep.subr.mxu0 0.0
  %299 = vmatpush1.msra.mxu0 0.0
  %300 = vmatprep.subr.mxu0 0.0
  %301 = vmatpush1.msra.mxu0 0.0
  %302 = vmatprep.subr.mxu0 0.0
  %303 = vmatpush1.msra.mxu0 0.0
  %304 = vmatprep.subr.mxu0 0.0
  %305 = vmatpush1.msra.mxu0 0.0
  %306 = vmatprep.subr.mxu0 0.0
  %307 = vmatpush1.msra.mxu0 0.0
  %308 = vmatprep.subr.mxu0 0.0
  %309 = vmatpush1.msra.mxu0 0.0
  %310 = vmatprep.subr.mxu0 0.0
  %311 = vmatpush1.msra.mxu0 0.0
  %312 = vmatprep.subr.mxu0 0.0
  %313 = vmatpush1.msra.mxu0 0.0
  %314 = vmatprep.subr.mxu0 0.0
  %315 = vmatpush1.msra.mxu0 0.0
  %316 = vmatprep.subr.mxu0 0.0
  %317 = vmatpush1.msra.mxu0 0.0
  %318 = vmatprep.subr.mxu0 0.0
  %319 = vmatpush1.msra.mxu0 0.0
  %320 = vmatprep.subr.mxu0 0.0
  %321 = vmatpush1.msra.mxu0 0.0
  %322 = vmatprep.subr.mxu0 0.0
  %323 = vmatpush1.msra.mxu0 0.0
  %324 = vmatprep.subr.mxu0 0.0
  %325 = vmatpush1.msra.mxu0 0.0
  %326 = vmatprep.subr.mxu0 0.0
  %327 = vmatpush1.msra.mxu0 0.0
  %328 = vmatprep.subr.mxu0 0.0
  %329 = vmatpush1.msra.mxu0 0.0
  %330 = vmatprep.subr.mxu0 0.0
  %331 = vmatpush1.msra.mxu0 0.0
  %332 = vmatprep.subr.mxu0 0.0
  %333 = vmatpush1.msra.mxu0 0.0
  %334 = vmatprep.subr.mxu0 0.0
  %335 = vmatpush1.msra.mxu0 0.0
  %336 = vmatprep.subr.mxu0 0.0
  %337 = vmatpush1.msra.mxu0 0.0
  %338 = vmatprep.subr.mxu0 0.0
  %339 = vmatpush1.msra.mxu0 0.0
  %340 = vmatprep.subr.mxu0 0.0
  %341 = vmatpush1.msra.mxu0 0.0
  %342 = vmatprep.subr.mxu0 0.0
  %343 = vmatpush1.msra.mxu0 0.0
  %344 = vmatprep.mubr.f32.mxu0 0.0
  %345 = vmatmul.mubr.f32.gmra.mrb[0].mxu0 %v278
  %v346 = vpop.f32.mrb[0].mxu0
  %v347 = vadd.f32 %v275, %v346
  %v348 = vpop.f32.mrb[0].mxu0
  %349 = vdwg.mxu0
  %350 = vst [vmem:[%s7] sm:$0xf] %v347
  // Predicated region
  $region30: #{tpu_custom_call.1} parent=0 // pred_check
    _
  $region31: #{tpu_custom_call.1} parent=0 // pred_check_branch
    %352 = sbr.rel (0) target = $region33
  $region32: #{tpu_custom_call.1} parent=0 // pred_region
    _
  $region33: #{tpu_custom_call.1} parent=0 // pred_fallthru
    _
  // Predicated region
  $region34: #{tpu_custom_call.1} parent=0 // pred_check
    _
  $region35: #{tpu_custom_call.1} parent=0 // pred_check_branch
    %354 = sbr.rel (0) target = $region37
  $region36: #{tpu_custom_call.1} parent=0 // pred_region
    _
  $region37: #{tpu_custom_call.1} parent=0 // pred_fallthru
    _

</llo_original>
